<compile_context>
chip_gen: v5e
topology: v5e:2x2
jax: 0.10.0
libtpu: 0.0.40
codegen_flags: <defaults>
</compile_context>

<pallas_src>
import functools
import math

import jax
import jax.numpy as jnp
from jax.experimental import pallas as pl
from jax.experimental.pallas import tpu as pltpu

LANES = 128
SUBLANES = 8
CHUNK_M = 64      # rows per in-kernel compute chunk (8 f32 vregs per array)
ROW_ALIGN = 128   # slab rows padded to this so every tile is whole chunks


def _chip_config():
    """Return (num_splits, max_tile_m, vmem_limit_bytes) per TPU generation."""
    kind = ""
    try:
        kind = jax.devices()[0].device_kind.lower()
    except Exception:
        pass
    if "v7" in kind:
        # 2 TensorCores/chip, ~3.2 TB/s/TC: big tiles, shard rows across TCs.
        return 2, 16384, 40 << 20
    if "v6" in kind:
        # Single TC, 32 MiB default scoped VMEM: 8192-row tiles need no flag.
        return 1, 8192, None
    # v5e / unknown: stay under the 16 MiB default scoped VMEM, single TC.
    return 1, 4096, None


def _wing_loss_kernel(x_ref, t_ref, o_ref, *, w, inv_e, c, tile_m,
                      blocks_per_split, rows_valid, needs_mask):
    p = pl.program_id(0)   # TensorCore split ("parallel")
    j = pl.program_id(1)   # row-tile index within the split ("arbitrary")
    block_idx = p * blocks_per_split + j

    @pl.when(j == 0)
    def _():
        o_ref[...] = jnp.zeros_like(o_ref)

    nchunks = tile_m // CHUNK_M

    def chunk(i, masked):
        r0 = i * CHUNK_M
        if not isinstance(i, int):
            r0 = pl.multiple_of(r0, CHUNK_M)
        x = x_ref[pl.ds(r0, CHUNK_M), :].astype(jnp.float32)
        t = t_ref[pl.ds(r0, CHUNK_M), :].astype(jnp.float32)
        # Fold the ignore mask (t == -1 -> weight 0) into abs_diff; abs_diff==0
        # then selects w*log1p(0) == 0, identical to the reference.
        abs_diff = jnp.where(t == -1.0, 0.0, jnp.abs(x - t))
        y = jnp.where(abs_diff < w, w * jnp.log1p(abs_diff * inv_e),
                      abs_diff - c)
        if masked:
            # Zero rows past the real data (partial last tile / clamped
            # duplicate tile).  Only emitted on the slow path.
            row0 = block_idx * tile_m + r0
            local = jax.lax.broadcasted_iota(jnp.int32, (CHUNK_M, LANES), 0)
            y = jnp.where(row0 + local < rows_valid, y, 0.0)
        # Vreg-shaped accumulation straight into the resident output block
        # (VPU adds only; no cross-lane work in the hot loop).
        o_ref[...] += jnp.sum(
            y.reshape(CHUNK_M // SUBLANES, SUBLANES, LANES), axis=0)

    def run(masked):
        if nchunks <= 8:
            for i in range(nchunks):        # fully static, tiny tiles
                chunk(i, masked)
        else:
            def body(i, carry):
                chunk(i, masked)
                return carry
            jax.lax.fori_loop(0, nchunks, body, 0, unroll=2)

    if needs_mask:
        # Interior tiles take the select-free fast path; only the final
        # partial / duplicate tile pays for the row mask.
        tile_is_full = (block_idx + 1) * tile_m <= rows_valid

        @pl.when(tile_is_full)
        def _():
            run(False)

        @pl.when(jnp.logical_not(tile_is_full))
        def _():
            run(True)
    else:
        run(False)


def wing_loss(x, t, w=10.0, e=2.0, sigma=1):
    """Pallas implementation of WingLoss.forward. Returns a scalar (f32)."""
    del sigma  # unused in the reference forward
    w = float(w)
    e = float(e)
    inv_e = 1.0 / e
    c = w - w * math.log(1.0 + w / e)

    assert x.shape == t.shape
    n = int(x.size)

    # Keep the native floating dtype (bf16/f16 inputs halve HBM bytes for this
    # purely memory-bound kernel); the kernel upcasts per-chunk to f32.
    if not jnp.issubdtype(jnp.asarray(x).dtype, jnp.floating):
        x = jnp.asarray(x).astype(jnp.float32)
    x = jnp.asarray(x)
    t = jnp.asarray(t).astype(x.dtype)

    x_flat = jnp.ravel(x)
    t_flat = jnp.ravel(t)

    # Lane-dense (m, 128) slab with m a multiple of ROW_ALIGN so every DMA tile
    # is a whole number of CHUNK_M-row compute chunks.  Padding targets are -1
    # so padded elements contribute exactly 0.
    elems = ROW_ALIGN * LANES
    n_pad = (-n) % elems
    if n_pad:
        x_flat = jnp.concatenate([x_flat, jnp.zeros((n_pad,), x_flat.dtype)])
        t_flat = jnp.concatenate(
            [t_flat, jnp.full((n_pad,), -1.0, t_flat.dtype)])
    m = (n + n_pad) // LANES
    x2 = x_flat.reshape(m, LANES)
    t2 = t_flat.reshape(m, LANES)

    num_splits, max_tile_m, vmem_limit = _chip_config()
    tile_m = min(max_tile_m, m)                      # multiple of ROW_ALIGN
    nblocks = pl.cdiv(m, tile_m)
    blocks_per_split = pl.cdiv(nblocks, num_splits)
    needs_mask = (m % tile_m != 0) or (num_splits * blocks_per_split != nblocks)

    def row_block(pp, jj):
        # Clamp so the DMA never walks past the slab; logically out-of-range
        # tiles are zeroed by the in-kernel row mask (slow path only).
        return (jnp.minimum(pp * blocks_per_split + jj, nblocks - 1), 0)

    kernel = functools.partial(
        _wing_loss_kernel, w=w, inv_e=inv_e, c=c, tile_m=tile_m,
        blocks_per_split=blocks_per_split, rows_valid=m, needs_mask=needs_mask)

    cp_kwargs = dict(dimension_semantics=("parallel", "arbitrary"))
    if vmem_limit is not None:
        cp_kwargs["vmem_limit_bytes"] = vmem_limit

    bytes_in = (x2.size * x2.dtype.itemsize + t2.size * t2.dtype.itemsize
                + num_splits * SUBLANES * LANES * 4)

    partials = pl.pallas_call(
        kernel,
        out_shape=jax.ShapeDtypeStruct((num_splits * SUBLANES, LANES),
                                       jnp.float32),
        grid_spec=pltpu.PrefetchScalarGridSpec(
            num_scalar_prefetch=0,
            grid=(num_splits, blocks_per_split),
            in_specs=[
                pl.BlockSpec((tile_m, LANES), row_block),
                pl.BlockSpec((tile_m, LANES), row_block),
            ],
            out_specs=pl.BlockSpec((SUBLANES, LANES), lambda pp, jj: (pp, 0)),
        ),
        compiler_params=pltpu.CompilerParams(**cp_kwargs),
        cost_estimate=pl.CostEstimate(
            flops=6 * n, transcendentals=n, bytes_accessed=bytes_in),
    )(x2, t2)

    # Sum the per-core (8,128) partials — one tiny XLA reduction.
    return jnp.sum(partials)


def wing_loss_ref(x, t, w=10.0, e=2.0):
    """Pure-JAX reference matching the PyTorch module."""
    c = w - w * jnp.log(1.0 + w / e)
    weight = jnp.where(t == -1.0, 0.0, 1.0)
    diff = weight * (x.astype(jnp.float32) - t.astype(jnp.float32))
    abs_diff = jnp.abs(diff)
    flag = (abs_diff < w).astype(jnp.float32)
    y = flag * w * jnp.log(1.0 + abs_diff / e) + (1.0 - flag) * (abs_diff - c)
    return jnp.sum(y)


if __name__ == "__main__":
    key = jax.random.PRNGKey(0)
    kx, kt, km = jax.random.split(key, 3)

    B, C, H, W = 2, 4, 16, 16  # NCHW, like the PyTorch inputs
    x = jax.random.normal(kx, (B, C, H, W), dtype=jnp.float32) * 15.0
    t = jax.random.normal(kt, (B, C, H, W), dtype=jnp.float32) * 5.0
    # Sprinkle in some ignored targets (t == -1) to exercise the masking path.
    mask = jax.random.bernoulli(km, 0.1, (B, C, H, W))
    t = jnp.where(mask, -1.0, t)

    out = wing_loss(x, t)
    out = jax.block_until_ready(out)

    ref = wing_loss_ref(x, t)
    assert jnp.allclose(out, ref, rtol=1e-5, atol=1e-2), (out, ref)

    print("KERNEL_OK")
</pallas_src>

<mosaic_0001>
module attributes {stable_mosaic.version = 11 : i64} {
  func.func @_wing_loss_kernel(%arg0: i32, %arg1: i32, %arg2: memref<128x128xf32, #tpu.memory_space<vmem>>, %arg3: memref<128x128xf32, #tpu.memory_space<vmem>>, %arg4: memref<8x128xf32, #tpu.memory_space<vmem>>) attributes {dimension_semantics = [#tpu.dimension_semantics<parallel>, #tpu.dimension_semantics<arbitrary>], iteration_bounds = array<i64: 1, 1>, scalar_prefetch = 0 : i64, scratch_operands = 0 : i64, tpu.core_type = #tpu.core_type<tc>, window_params = [{transform_indices = @transform_0, window_bounds = array<i64: 128, 128>}, {transform_indices = @transform_1, window_bounds = array<i64: 128, 128>}, {transform_indices = @transform_2, window_bounds = array<i64: 8, 128>}]} {
    %c0_i32 = arith.constant 0 : i32
    %0 = arith.cmpi eq, %arg1, %c0_i32 : i32
    %1 = arith.extui %0 : i1 to i32
    %c0_i32_0 = arith.constant 0 : i32
    %2 = arith.cmpi ne, %1, %c0_i32_0 : i32
    scf.if %2 {
      %cst_28 = arith.constant 0.000000e+00 : f32
      %49 = vector.broadcast %cst_28 : f32 to vector<8x128xf32>
      %c0_29 = arith.constant 0 : index
      %c0_30 = arith.constant 0 : index
      %50 = vector.load %arg4[%c0_29, %c0_30] : memref<8x128xf32, #tpu.memory_space<vmem>>, vector<8x128xf32>
      tpu.vector_store %arg4[%c0_29, %c0_30], %49 {strides = array<i32>} : memref<8x128xf32, #tpu.memory_space<vmem>>, vector<8x128xf32>,
    } else {
    }
    %c0 = arith.constant 0 : index
    %c0_1 = arith.constant 0 : index
    %3 = vector.load %arg2[%c0, %c0_1] : memref<128x128xf32, #tpu.memory_space<vmem>>, vector<64x128xf32>
    %c0_2 = arith.constant 0 : index
    %c0_3 = arith.constant 0 : index
    %4 = vector.load %arg3[%c0_2, %c0_3] : memref<128x128xf32, #tpu.memory_space<vmem>>, vector<64x128xf32>
    %cst = arith.constant -1.000000e+00 : f32
    %5 = vector.broadcast %cst : f32 to vector<64x128xf32>
    %6 = arith.cmpf oeq, %4, %5 : vector<64x128xf32>
    %7 = arith.subf %3, %4 : vector<64x128xf32>
    %8 = math.absf %7 : vector<64x128xf32>
    %cst_4 = arith.constant 0.000000e+00 : f32
    %9 = vector.broadcast %cst_4 : f32 to vector<64x128xf32>
    %10 = arith.select %6, %9, %8 : vector<64x128xi1>, vector<64x128xf32>
    %cst_5 = arith.constant 1.000000e+01 : f32
    %11 = vector.broadcast %cst_5 : f32 to vector<64x128xf32>
    %12 = arith.cmpf olt, %10, %11 : vector<64x128xf32>
    %cst_6 = arith.constant 5.000000e-01 : f32
    %13 = vector.broadcast %cst_6 : f32 to vector<64x128xf32>
    %14 = arith.mulf %10, %13 : vector<64x128xf32>
    %15 = math.log1p %14 : vector<64x128xf32>
    %cst_7 = arith.constant 1.000000e+01 : f32
    %16 = vector.broadcast %cst_7 : f32 to vector<64x128xf32>
    %17 = arith.mulf %16, %15 : vector<64x128xf32>
    %cst_8 = arith.constant -7.9175949 : f32
    %18 = vector.broadcast %cst_8 : f32 to vector<64x128xf32>
    %19 = arith.subf %10, %18 : vector<64x128xf32>
    %20 = arith.select %12, %17, %19 : vector<64x128xi1>, vector<64x128xf32>
    %c0_9 = arith.constant 0 : index
    %c0_10 = arith.constant 0 : index
    %21 = vector.load %arg4[%c0_9, %c0_10] : memref<8x128xf32, #tpu.memory_space<vmem>>, vector<8x128xf32>
    %22 = vector.shape_cast %20 : vector<64x128xf32> to vector<8x8x128xf32>
    %cst_11 = arith.constant dense<0.000000e+00> : vector<8x128xf32>
    %23 = vector.multi_reduction <add>, %22, %cst_11 [0] : vector<8x8x128xf32> to vector<8x128xf32>
    %24 = arith.addf %21, %23 : vector<8x128xf32>
    %c0_12 = arith.constant 0 : index
    %c0_13 = arith.constant 0 : index
    %25 = vector.load %arg4[%c0_12, %c0_13] : memref<8x128xf32, #tpu.memory_space<vmem>>, vector<8x128xf32>
    tpu.vector_store %arg4[%c0_12, %c0_13], %24 {strides = array<i32>} : memref<8x128xf32, #tpu.memory_space<vmem>>, vector<8x128xf32>,
    %c64 = arith.constant 64 : index
    %c0_14 = arith.constant 0 : index
    %26 = vector.load %arg2[%c64, %c0_14] : memref<128x128xf32, #tpu.memory_space<vmem>>, vector<64x128xf32>
    %c64_15 = arith.constant 64 : index
    %c0_16 = arith.constant 0 : index
    %27 = vector.load %arg3[%c64_15, %c0_16] : memref<128x128xf32, #tpu.memory_space<vmem>>, vector<64x128xf32>
    %cst_17 = arith.constant -1.000000e+00 : f32
    %28 = vector.broadcast %cst_17 : f32 to vector<64x128xf32>
    %29 = arith.cmpf oeq, %27, %28 : vector<64x128xf32>
    %30 = arith.subf %26, %27 : vector<64x128xf32>
    %31 = math.absf %30 : vector<64x128xf32>
    %cst_18 = arith.constant 0.000000e+00 : f32
    %32 = vector.broadcast %cst_18 : f32 to vector<64x128xf32>
    %33 = arith.select %29, %32, %31 : vector<64x128xi1>, vector<64x128xf32>
    %cst_19 = arith.constant 1.000000e+01 : f32
    %34 = vector.broadcast %cst_19 : f32 to vector<64x128xf32>
    %35 = arith.cmpf olt, %33, %34 : vector<64x128xf32>
    %cst_20 = arith.constant 5.000000e-01 : f32
    %36 = vector.broadcast %cst_20 : f32 to vector<64x128xf32>
    %37 = arith.mulf %33, %36 : vector<64x128xf32>
    %38 = math.log1p %37 : vector<64x128xf32>
    %cst_21 = arith.constant 1.000000e+01 : f32
    %39 = vector.broadcast %cst_21 : f32 to vector<64x128xf32>
    %40 = arith.mulf %39, %38 : vector<64x128xf32>
    %cst_22 = arith.constant -7.9175949 : f32
    %41 = vector.broadcast %cst_22 : f32 to vector<64x128xf32>
    %42 = arith.subf %33, %41 : vector<64x128xf32>
    %43 = arith.select %35, %40, %42 : vector<64x128xi1>, vector<64x128xf32>
    %c0_23 = arith.constant 0 : index
    %c0_24 = arith.constant 0 : index
    %44 = vector.load %arg4[%c0_23, %c0_24] : memref<8x128xf32, #tpu.memory_space<vmem>>, vector<8x128xf32>
    %45 = vector.shape_cast %43 : vector<64x128xf32> to vector<8x8x128xf32>
    %cst_25 = arith.constant dense<0.000000e+00> : vector<8x128xf32>
    %46 = vector.multi_reduction <add>, %45, %cst_25 [0] : vector<8x8x128xf32> to vector<8x128xf32>
    %47 = arith.addf %44, %46 : vector<8x128xf32>
    %c0_26 = arith.constant 0 : index
    %c0_27 = arith.constant 0 : index
    %48 = vector.load %arg4[%c0_26, %c0_27] : memref<8x128xf32, #tpu.memory_space<vmem>>, vector<8x128xf32>
    tpu.vector_store %arg4[%c0_26, %c0_27], %47 {strides = array<i32>} : memref<8x128xf32, #tpu.memory_space<vmem>>, vector<8x128xf32>,
    return
  }
  func.func @transform_0(%arg0: i32, %arg1: i32) -> (i32, i32) {
    %c1_i32 = arith.constant 1 : i32
    %0 = arith.muli %arg0, %c1_i32 : i32
    %1 = arith.addi %0, %arg1 : i32
    %c0_i32 = arith.constant 0 : i32
    %2 = arith.minsi %1, %c0_i32 : i32
    %c0_i32_0 = arith.constant 0 : i32
    %c0_i32_1 = arith.constant 0 : i32
    return %2, %c0_i32_0 : i32, i32
  }
  func.func @transform_1(%arg0: i32, %arg1: i32) -> (i32, i32) {
    %c1_i32 = arith.constant 1 : i32
    %0 = arith.muli %arg0, %c1_i32 : i32
    %1 = arith.addi %0, %arg1 : i32
    %c0_i32 = arith.constant 0 : i32
    %2 = arith.minsi %1, %c0_i32 : i32
    %c0_i32_0 = arith.constant 0 : i32
    %c0_i32_1 = arith.constant 0 : i32
    return %2, %c0_i32_0 : i32, i32
  }
  func.func @transform_2(%arg0: i32, %arg1: i32) -> (i32, i32) {
    %c0_i32 = arith.constant 0 : i32
    %c0_i32_0 = arith.constant 0 : i32
    return %arg0, %c0_i32 : i32, i32
  }
}

</mosaic_0001>

<llo_original>
// kernel: tpu_custom_call.1
$region0: #{tpu_custom_call.1}
  #allocation0 [shape = 'u32[]', space=smem, size = 0x4, offset = 0x4, fixed_abs, tag = 'smem constant byte address 0x4 - core index']
  #allocation1 [shape = 'u32[72,128]{1,0:T(1,128)}', space=vmem, size = 0x9000, scoped, tag = 'internal scratch']
  %s0 = inlined_call_operand.hbm [shape: f32[128,128], index: 0, kind: input, shape index: {}]
  %s1 = inlined_call_operand.hbm [shape: f32[128,128], index: 1, kind: input, shape index: {}]
  %s2 = inlined_call_operand.hbm [shape: f32[8,128], index: 2, kind: output, shape index: {}]
  %s3 = sld [smem:[#allocation0]]
  $region30: #{tpu_custom_call.1} parent=0
    _
  %s5 = ssub.s32 1, %s3
  %s6 = scalar_select 0, %s5, %s3
  $region1: #{tpu_custom_call.1} parent=0
    #allocation2 [shape = 'u8[65536]{0}', space=vmem, size = 0x10000, scoped, tag = 'input window, operand 0, single buffered']
    #allocation3 [shape = 's32[1]{0}', space=sflag, size = 0x4, scoped, tag = 'scoped memory for tpu_custom_call.1']
    #allocation4 [shape = 's32[1]{0}', space=sflag, size = 0x4, scoped, tag = 'scoped memory for tpu_custom_call.1']
    #allocation5 [shape = 'u8[65536]{0}', space=vmem, size = 0x10000, scoped, tag = 'input window, operand 1, single buffered']
    #allocation6 [shape = 's32[1]{0}', space=sflag, size = 0x4, scoped, tag = 'scoped memory for tpu_custom_call.1']
    #allocation7 [shape = 'u8[4096]{0}', space=vmem, size = 0x1000, scoped, tag = 'output window, operand 0, single buffered']
    %7 = vsyncpa [#allocation3], 0
    %8 = vsyncpa [#allocation6], 0
    %9 = vsyncpa [#allocation4], 0
    // Predicated region
    $region2: #{tpu_custom_call.1} parent=1 // pred_check
      _
    $region3: #{tpu_custom_call.1} parent=1 // pred_check_branch
      %11 = sbr.rel (0) target = $region5
    $region4: #{tpu_custom_call.1} parent=1 // pred_region
      %s12 = sadd.s32 0, 0
      %p13 = scmp.lt.s32.totalorder %s12, 0
      %s14 = scalar_select %p13, %s12, 0
      %s15 = smul.u32 16, %s14
      %17 = vsyncadd [#allocation3], 0
      %s18 = smul.addr %s15, 8
      %s19 = scalar_lea.hbm %s0, %s18
      %s20 = sshll.u32 %s19, 4
      %s21 = int_to_ptr.hbm [resolvable:$true] %s20
      %s22 = sshll.u32 [#allocation2], 4
      %s23 = int_to_ptr.vmem [resolvable:$true] %s22
      %28 = dma.hbm_to_vmem [thread:$0]  %s21, 2048, %s23, [#allocation3], 128, 128, 8
    $region5: #{tpu_custom_call.1} parent=1 // pred_fallthru
      _
    // Predicated region
    $region6: #{tpu_custom_call.1} parent=1 // pred_check
      _
    $region7: #{tpu_custom_call.1} parent=1 // pred_check_branch
      %30 = sbr.rel (0) target = $region9
    $region8: #{tpu_custom_call.1} parent=1 // pred_region
      %s31 = sadd.s32 0, 0
      %p32 = scmp.lt.s32.totalorder %s31, 0
      %s33 = scalar_select %p32, %s31, 0
      %s34 = smul.u32 16, %s33
      %36 = vsyncadd [#allocation6], 0
      %s37 = smul.addr %s34, 8
      %s38 = scalar_lea.hbm %s1, %s37
      %s39 = sshll.u32 %s38, 4
      %s40 = int_to_ptr.hbm [resolvable:$true] %s39
      %s41 = sshll.u32 [#allocation5], 4
      %s42 = int_to_ptr.vmem [resolvable:$true] %s41
      %47 = dma.hbm_to_vmem [thread:$0]  %s40, 2048, %s42, [#allocation6], 128, 128, 8
    $region9: #{tpu_custom_call.1} parent=1 // pred_fallthru
      _
    // Predicated region
    $region10: #{tpu_custom_call.1} parent=1 // pred_check
      _
    $region11: #{tpu_custom_call.1} parent=1 // pred_check_branch
      %49 = sbr.rel (0) target = $region13
    $region12: #{tpu_custom_call.1} parent=1 // pred_region
      %51 = dma.done [#allocation3], 2048
    $region13: #{tpu_custom_call.1} parent=1 // pred_fallthru
      _
    // Predicated region
    $region14: #{tpu_custom_call.1} parent=1 // pred_check
      _
    $region15: #{tpu_custom_call.1} parent=1 // pred_check_branch
      %53 = sbr.rel (0) target = $region17
    $region16: #{tpu_custom_call.1} parent=1 // pred_region
      %55 = dma.done [#allocation6], 2048
    $region17: #{tpu_custom_call.1} parent=1 // pred_fallthru
      _
    %s56 = sadd.s32 0, 0
    %p57 = scmp.lt.s32.totalorder %s56, 0
    %s58 = scalar_select %p57, %s56, 0
    %s59 = smul.u32 16, %s58
    %s60 = sadd.s32 0, 0
    %p61 = scmp.lt.s32.totalorder %s60, 0
    %s62 = scalar_select %p61, %s60, 0
    %s63 = smul.u32 16, %s62
    %p64 = scmp.eq.s32.totalorder 0, 0
    // Predicated region
    $region18: #{tpu_custom_call.1} parent=1 // pred_check
      %p65 = pneg %p64
    $region19: #{tpu_custom_call.1} parent=1 // pred_check_branch
      %67 = sbr.rel (%p65) target = $region21
    $region20: #{tpu_custom_call.1} parent=1 // pred_region
      %68 = vst [vmem:[#allocation7] sm:$0xff] 0.0
    $region21: #{tpu_custom_call.1} parent=1 // pred_fallthru
      _
    %v69 = vld [vmem:[#allocation2] sm:$0xff]
    %v70 = vld [vmem:[#allocation2 + $0x8] sm:$0xff]
    %v71 = vld [vmem:[#allocation2 + $0x10] sm:$0xff]
    %v72 = vld [vmem:[#allocation2 + $0x18] sm:$0xff]
    %v73 = vld [vmem:[#allocation2 + $0x20] sm:$0xff]
    %v74 = vld [vmem:[#allocation2 + $0x28] sm:$0xff]
    %v75 = vld [vmem:[#allocation2 + $0x30] sm:$0xff]
    %v76 = vld [vmem:[#allocation2 + $0x38] sm:$0xff]
    %v77 = vld [vmem:[#allocation5] sm:$0xff]
    %v78 = vld [vmem:[#allocation5 + $0x8] sm:$0xff]
    %v79 = vld [vmem:[#allocation5 + $0x10] sm:$0xff]
    %v80 = vld [vmem:[#allocation5 + $0x18] sm:$0xff]
    %v81 = vld [vmem:[#allocation5 + $0x20] sm:$0xff]
    %v82 = vld [vmem:[#allocation5 + $0x28] sm:$0xff]
    %v83 = vld [vmem:[#allocation5 + $0x30] sm:$0xff]
    %v84 = vld [vmem:[#allocation5 + $0x38] sm:$0xff]
    %vm85 = vcmp.eq.f32.partialorder %v77, -1.0
    %vm86 = vcmp.eq.f32.partialorder %v78, -1.0
    %vm87 = vcmp.eq.f32.partialorder %v79, -1.0
    %vm88 = vcmp.eq.f32.partialorder %v80, -1.0
    %vm89 = vcmp.eq.f32.partialorder %v81, -1.0
    %vm90 = vcmp.eq.f32.partialorder %v82, -1.0
    %vm91 = vcmp.eq.f32.partialorder %v83, -1.0
    %vm92 = vcmp.eq.f32.partialorder %v84, -1.0
    %v93 = vsub.f32 %v69, %v77
    %v94 = vsub.f32 %v70, %v78
    %v95 = vsub.f32 %v71, %v79
    %v96 = vsub.f32 %v72, %v80
    %v97 = vsub.f32 %v73, %v81
    %v98 = vsub.f32 %v74, %v82
    %v99 = vsub.f32 %v75, %v83
    %v100 = vsub.f32 %v76, %v84
    %v101 = vand.u32 2147483647, %v93
    %v102 = vand.u32 2147483647, %v94
    %v103 = vand.u32 2147483647, %v95
    %v104 = vand.u32 2147483647, %v96
    %v105 = vand.u32 2147483647, %v97
    %v106 = vand.u32 2147483647, %v98
    %v107 = vand.u32 2147483647, %v99
    %v108 = vand.u32 2147483647, %v100
    %v109 = vsel %vm85, 0.0, %v101
    %v110 = vsel %vm86, 0.0, %v102
    %v111 = vsel %vm87, 0.0, %v103
    %v112 = vsel %vm88, 0.0, %v104
    %v113 = vsel %vm89, 0.0, %v105
    %v114 = vsel %vm90, 0.0, %v106
    %v115 = vsel %vm91, 0.0, %v107
    %v116 = vsel %vm92, 0.0, %v108
    %vm117 = vcmp.lt.f32.partialorder %v109, 10.0
    %vm118 = vcmp.lt.f32.partialorder %v110, 10.0
    %vm119 = vcmp.lt.f32.partialorder %v111, 10.0
    %vm120 = vcmp.lt.f32.partialorder %v112, 10.0
    %vm121 = vcmp.lt.f32.partialorder %v113, 10.0
    %vm122 = vcmp.lt.f32.partialorder %v114, 10.0
    %vm123 = vcmp.lt.f32.partialorder %v115, 10.0
    %vm124 = vcmp.lt.f32.partialorder %v116, 10.0
    %v125 = vmul.f32 %v109, 0.5
    %v126 = vmul.f32 %v110, 0.5
    %v127 = vmul.f32 %v111, 0.5
    %v128 = vmul.f32 %v112, 0.5
    %v129 = vmul.f32 %v113, 0.5
    %v130 = vmul.f32 %v114, 0.5
    %v131 = vmul.f32 %v115, 0.5
    %v132 = vmul.f32 %v116, 0.5
    %v133 = vadd.f32 %v125, 1.0
    %v134 = vlog2.pop %v133
    %v135 = vmul.f32 %v134, 0.6931472
    %v136 = vmul.f32 -0.5, %v125
    %v137 = vadd.f32 %v136, 1.0
    %v138 = vmul.f32 %v137, %v125
    %v139 = vand.u32 2147483647, %v125
    %vm140 = vcmp.lt.f32.partialorder %v139, 0.0004427343
    %v141 = vsel %vm140, %v138, %v135
    %v142 = vadd.f32 %v126, 1.0
    %v143 = vlog2.pop %v142
    %v144 = vmul.f32 %v143, 0.6931472
    %v145 = vmul.f32 -0.5, %v126
    %v146 = vadd.f32 %v145, 1.0
    %v147 = vmul.f32 %v146, %v126
    %v148 = vand.u32 2147483647, %v126
    %vm149 = vcmp.lt.f32.partialorder %v148, 0.0004427343
    %v150 = vsel %vm149, %v147, %v144
    %v151 = vadd.f32 %v127, 1.0
    %v152 = vlog2.pop %v151
    %v153 = vmul.f32 %v152, 0.6931472
    %v154 = vmul.f32 -0.5, %v127
    %v155 = vadd.f32 %v154, 1.0
    %v156 = vmul.f32 %v155, %v127
    %v157 = vand.u32 2147483647, %v127
    %vm158 = vcmp.lt.f32.partialorder %v157, 0.0004427343
    %v159 = vsel %vm158, %v156, %v153
    %v160 = vadd.f32 %v128, 1.0
    %v161 = vlog2.pop %v160
    %v162 = vmul.f32 %v161, 0.6931472
    %v163 = vmul.f32 -0.5, %v128
    %v164 = vadd.f32 %v163, 1.0
    %v165 = vmul.f32 %v164, %v128
    %v166 = vand.u32 2147483647, %v128
    %vm167 = vcmp.lt.f32.partialorder %v166, 0.0004427343
    %v168 = vsel %vm167, %v165, %v162
    %v169 = vadd.f32 %v129, 1.0
    %v170 = vlog2.pop %v169
    %v171 = vmul.f32 %v170, 0.6931472
    %v172 = vmul.f32 -0.5, %v129
    %v173 = vadd.f32 %v172, 1.0
    %v174 = vmul.f32 %v173, %v129
    %v175 = vand.u32 2147483647, %v129
    %vm176 = vcmp.lt.f32.partialorder %v175, 0.0004427343
    %v177 = vsel %vm176, %v174, %v171
    %v178 = vadd.f32 %v130, 1.0
    %v179 = vlog2.pop %v178
    %v180 = vmul.f32 %v179, 0.6931472
    %v181 = vmul.f32 -0.5, %v130
    %v182 = vadd.f32 %v181, 1.0
    %v183 = vmul.f32 %v182, %v130
    %v184 = vand.u32 2147483647, %v130
    %vm185 = vcmp.lt.f32.partialorder %v184, 0.0004427343
    %v186 = vsel %vm185, %v183, %v180
    %v187 = vadd.f32 %v131, 1.0
    %v188 = vlog2.pop %v187
    %v189 = vmul.f32 %v188, 0.6931472
    %v190 = vmul.f32 -0.5, %v131
    %v191 = vadd.f32 %v190, 1.0
    %v192 = vmul.f32 %v191, %v131
    %v193 = vand.u32 2147483647, %v131
    %vm194 = vcmp.lt.f32.partialorder %v193, 0.0004427343
    %v195 = vsel %vm194, %v192, %v189
    %v196 = vadd.f32 %v132, 1.0
    %v197 = vlog2.pop %v196
    %v198 = vmul.f32 %v197, 0.6931472
    %v199 = vmul.f32 -0.5, %v132
    %v200 = vadd.f32 %v199, 1.0
    %v201 = vmul.f32 %v200, %v132
    %v202 = vand.u32 2147483647, %v132
    %vm203 = vcmp.lt.f32.partialorder %v202, 0.0004427343
    %v204 = vsel %vm203, %v201, %v198
    %v205 = vmul.f32 %v141, 10.0
    %v206 = vmul.f32 %v150, 10.0
    %v207 = vmul.f32 %v159, 10.0
    %v208 = vmul.f32 %v168, 10.0
    %v209 = vmul.f32 %v177, 10.0
    %v210 = vmul.f32 %v186, 10.0
    %v211 = vmul.f32 %v195, 10.0
    %v212 = vmul.f32 %v204, 10.0
    %v213 = vsub.f32 %v109, -7.917595
    %v214 = vsub.f32 %v110, -7.917595
    %v215 = vsub.f32 %v111, -7.917595
    %v216 = vsub.f32 %v112, -7.917595
    %v217 = vsub.f32 %v113, -7.917595
    %v218 = vsub.f32 %v114, -7.917595
    %v219 = vsub.f32 %v115, -7.917595
    %v220 = vsub.f32 %v116, -7.917595
    %v221 = vsel %vm117, %v205, %v213
    %v222 = vsel %vm118, %v206, %v214
    %v223 = vsel %vm119, %v207, %v215
    %v224 = vsel %vm120, %v208, %v216
    %v225 = vsel %vm121, %v209, %v217
    %v226 = vsel %vm122, %v210, %v218
    %v227 = vsel %vm123, %v211, %v219
    %v228 = vsel %vm124, %v212, %v220
    %v229 = vld [vmem:[#allocation7] sm:$0xff]
    %v230 = vadd.f32 %v221, %v222
    %v231 = vadd.f32 %v230, %v223
    %v232 = vadd.f32 %v231, %v224
    %v233 = vadd.f32 %v232, %v225
    %v234 = vadd.f32 %v233, %v226
    %v235 = vadd.f32 %v234, %v227
    %v236 = vadd.f32 %v235, %v228
    %v237 = vadd.f32 %v229, %v236
    %238 = vst [vmem:[#allocation7] sm:$0xff] %v237
    %v239 = vld [vmem:[#allocation2 + $0x40] sm:$0xff]
    %v240 = vld [vmem:[#allocation2 + $0x48] sm:$0xff]
    %v241 = vld [vmem:[#allocation2 + $0x50] sm:$0xff]
    %v242 = vld [vmem:[#allocation2 + $0x58] sm:$0xff]
    %v243 = vld [vmem:[#allocation2 + $0x60] sm:$0xff]
    %v244 = vld [vmem:[#allocation2 + $0x68] sm:$0xff]
    %v245 = vld [vmem:[#allocation2 + $0x70] sm:$0xff]
    %v246 = vld [vmem:[#allocation2 + $0x78] sm:$0xff]
    %v247 = vld [vmem:[#allocation5 + $0x40] sm:$0xff]
    %v248 = vld [vmem:[#allocation5 + $0x48] sm:$0xff]
    %v249 = vld [vmem:[#allocation5 + $0x50] sm:$0xff]
    %v250 = vld [vmem:[#allocation5 + $0x58] sm:$0xff]
    %v251 = vld [vmem:[#allocation5 + $0x60] sm:$0xff]
    %v252 = vld [vmem:[#allocation5 + $0x68] sm:$0xff]
    %v253 = vld [vmem:[#allocation5 + $0x70] sm:$0xff]
    %v254 = vld [vmem:[#allocation5 + $0x78] sm:$0xff]
    %vm255 = vcmp.eq.f32.partialorder %v247, -1.0
    %vm256 = vcmp.eq.f32.partialorder %v248, -1.0
    %vm257 = vcmp.eq.f32.partialorder %v249, -1.0
    %vm258 = vcmp.eq.f32.partialorder %v250, -1.0
    %vm259 = vcmp.eq.f32.partialorder %v251, -1.0
    %vm260 = vcmp.eq.f32.partialorder %v252, -1.0
    %vm261 = vcmp.eq.f32.partialorder %v253, -1.0
    %vm262 = vcmp.eq.f32.partialorder %v254, -1.0
    %v263 = vsub.f32 %v239, %v247
    %v264 = vsub.f32 %v240, %v248
    %v265 = vsub.f32 %v241, %v249
    %v266 = vsub.f32 %v242, %v250
    %v267 = vsub.f32 %v243, %v251
    %v268 = vsub.f32 %v244, %v252
    %v269 = vsub.f32 %v245, %v253
    %v270 = vsub.f32 %v246, %v254
    %v271 = vand.u32 2147483647, %v263
    %v272 = vand.u32 2147483647, %v264
    %v273 = vand.u32 2147483647, %v265
    %v274 = vand.u32 2147483647, %v266
    %v275 = vand.u32 2147483647, %v267
    %v276 = vand.u32 2147483647, %v268
    %v277 = vand.u32 2147483647, %v269
    %v278 = vand.u32 2147483647, %v270
    %v279 = vsel %vm255, 0.0, %v271
    %v280 = vsel %vm256, 0.0, %v272
    %v281 = vsel %vm257, 0.0, %v273
    %v282 = vsel %vm258, 0.0, %v274
    %v283 = vsel %vm259, 0.0, %v275
    %v284 = vsel %vm260, 0.0, %v276
    %v285 = vsel %vm261, 0.0, %v277
    %v286 = vsel %vm262, 0.0, %v278
    %vm287 = vcmp.lt.f32.partialorder %v279, 10.0
    %vm288 = vcmp.lt.f32.partialorder %v280, 10.0
    %vm289 = vcmp.lt.f32.partialorder %v281, 10.0
    %vm290 = vcmp.lt.f32.partialorder %v282, 10.0
    %vm291 = vcmp.lt.f32.partialorder %v283, 10.0
    %vm292 = vcmp.lt.f32.partialorder %v284, 10.0
    %vm293 = vcmp.lt.f32.partialorder %v285, 10.0
    %vm294 = vcmp.lt.f32.partialorder %v286, 10.0
    %v295 = vmul.f32 %v279, 0.5
    %v296 = vmul.f32 %v280, 0.5
    %v297 = vmul.f32 %v281, 0.5
    %v298 = vmul.f32 %v282, 0.5
    %v299 = vmul.f32 %v283, 0.5
    %v300 = vmul.f32 %v284, 0.5
    %v301 = vmul.f32 %v285, 0.5
    %v302 = vmul.f32 %v286, 0.5
    %v303 = vadd.f32 %v295, 1.0
    %v304 = vlog2.pop %v303
    %v305 = vmul.f32 %v304, 0.6931472
    %v306 = vmul.f32 -0.5, %v295
    %v307 = vadd.f32 %v306, 1.0
    %v308 = vmul.f32 %v307, %v295
    %v309 = vand.u32 2147483647, %v295
    %vm310 = vcmp.lt.f32.partialorder %v309, 0.0004427343
    %v311 = vsel %vm310, %v308, %v305
    %v312 = vadd.f32 %v296, 1.0
    %v313 = vlog2.pop %v312
    %v314 = vmul.f32 %v313, 0.6931472
    %v315 = vmul.f32 -0.5, %v296
    %v316 = vadd.f32 %v315, 1.0
    %v317 = vmul.f32 %v316, %v296
    %v318 = vand.u32 2147483647, %v296
    %vm319 = vcmp.lt.f32.partialorder %v318, 0.0004427343
    %v320 = vsel %vm319, %v317, %v314
    %v321 = vadd.f32 %v297, 1.0
    %v322 = vlog2.pop %v321
    %v323 = vmul.f32 %v322, 0.6931472
    %v324 = vmul.f32 -0.5, %v297
    %v325 = vadd.f32 %v324, 1.0
    %v326 = vmul.f32 %v325, %v297
    %v327 = vand.u32 2147483647, %v297
    %vm328 = vcmp.lt.f32.partialorder %v327, 0.0004427343
    %v329 = vsel %vm328, %v326, %v323
    %v330 = vadd.f32 %v298, 1.0
    %v331 = vlog2.pop %v330
    %v332 = vmul.f32 %v331, 0.6931472
    %v333 = vmul.f32 -0.5, %v298
    %v334 = vadd.f32 %v333, 1.0
    %v335 = vmul.f32 %v334, %v298
    %v336 = vand.u32 2147483647, %v298
    %vm337 = vcmp.lt.f32.partialorder %v336, 0.0004427343
    %v338 = vsel %vm337, %v335, %v332
    %v339 = vadd.f32 %v299, 1.0
    %v340 = vlog2.pop %v339
    %v341 = vmul.f32 %v340, 0.6931472
    %v342 = vmul.f32 -0.5, %v299
    %v343 = vadd.f32 %v342, 1.0
    %v344 = vmul.f32 %v343, %v299
    %v345 = vand.u32 2147483647, %v299
    %vm346 = vcmp.lt.f32.partialorder %v345, 0.0004427343
    %v347 = vsel %vm346, %v344, %v341
    %v348 = vadd.f32 %v300, 1.0
    %v349 = vlog2.pop %v348
    %v350 = vmul.f32 %v349, 0.6931472
    %v351 = vmul.f32 -0.5, %v300
    %v352 = vadd.f32 %v351, 1.0
    %v353 = vmul.f32 %v352, %v300
    %v354 = vand.u32 2147483647, %v300
    %vm355 = vcmp.lt.f32.partialorder %v354, 0.0004427343
    %v356 = vsel %vm355, %v353, %v350
    %v357 = vadd.f32 %v301, 1.0
    %v358 = vlog2.pop %v357
    %v359 = vmul.f32 %v358, 0.6931472
    %v360 = vmul.f32 -0.5, %v301
    %v361 = vadd.f32 %v360, 1.0
    %v362 = vmul.f32 %v361, %v301
    %v363 = vand.u32 2147483647, %v301
    %vm364 = vcmp.lt.f32.partialorder %v363, 0.0004427343
    %v365 = vsel %vm364, %v362, %v359
    %v366 = vadd.f32 %v302, 1.0
    %v367 = vlog2.pop %v366
    %v368 = vmul.f32 %v367, 0.6931472
    %v369 = vmul.f32 -0.5, %v302
    %v370 = vadd.f32 %v369, 1.0
    %v371 = vmul.f32 %v370, %v302
    %v372 = vand.u32 2147483647, %v302
    %vm373 = vcmp.lt.f32.partialorder %v372, 0.0004427343
    %v374 = vsel %vm373, %v371, %v368
    %v375 = vmul.f32 %v311, 10.0
    %v376 = vmul.f32 %v320, 10.0
    %v377 = vmul.f32 %v329, 10.0
    %v378 = vmul.f32 %v338, 10.0
    %v379 = vmul.f32 %v347, 10.0
    %v380 = vmul.f32 %v356, 10.0
    %v381 = vmul.f32 %v365, 10.0
    %v382 = vmul.f32 %v374, 10.0
    %v383 = vsub.f32 %v279, -7.917595
    %v384 = vsub.f32 %v280, -7.917595
    %v385 = vsub.f32 %v281, -7.917595
    %v386 = vsub.f32 %v282, -7.917595
    %v387 = vsub.f32 %v283, -7.917595
    %v388 = vsub.f32 %v284, -7.917595
    %v389 = vsub.f32 %v285, -7.917595
    %v390 = vsub.f32 %v286, -7.917595
    %v391 = vsel %vm287, %v375, %v383
    %v392 = vsel %vm288, %v376, %v384
    %v393 = vsel %vm289, %v377, %v385
    %v394 = vsel %vm290, %v378, %v386
    %v395 = vsel %vm291, %v379, %v387
    %v396 = vsel %vm292, %v380, %v388
    %v397 = vsel %vm293, %v381, %v389
    %v398 = vsel %vm294, %v382, %v390
    %v399 = vld [vmem:[#allocation7] sm:$0xff]
    %v400 = vadd.f32 %v391, %v392
    %v401 = vadd.f32 %v400, %v393
    %v402 = vadd.f32 %v401, %v394
    %v403 = vadd.f32 %v402, %v395
    %v404 = vadd.f32 %v403, %v396
    %v405 = vadd.f32 %v404, %v397
    %v406 = vadd.f32 %v405, %v398
    %v407 = vadd.f32 %v399, %v406
    %408 = vst [vmem:[#allocation7] sm:$0xff] %v407
    // Predicated region
    $region22: #{tpu_custom_call.1} parent=1 // pred_check
      _
    $region23: #{tpu_custom_call.1} parent=1 // pred_check_branch
      %410 = sbr.rel (0) target = $region25
    $region24: #{tpu_custom_call.1} parent=1 // pred_region
      %412 = vsyncadd [#allocation4], 0
      %s414 = sshll.u32 [#allocation7], 4
      %s415 = int_to_ptr.vmem [resolvable:$true] %s414
      %s416 = sshll.u32 %s2, 4
      %s417 = int_to_ptr.hbm [resolvable:$true] %s416
      %419 = dma.vmem_to_hbm [thread:$0]  %s415, 128, %s417, [#allocation4]
    $region25: #{tpu_custom_call.1} parent=1 // pred_fallthru
      _
    // Predicated region
    $region26: #{tpu_custom_call.1} parent=1 // pred_check
      _
    $region27: #{tpu_custom_call.1} parent=1 // pred_check_branch
      %421 = sbr.rel (0) target = $region29
    $region28: #{tpu_custom_call.1} parent=1 // pred_region
      %423 = dma.done [#allocation4], 128
    $region29: #{tpu_custom_call.1} parent=1 // pred_fallthru
      _
    %424 = vsyncpa [#allocation3], 1
    %425 = vsyncpa [#allocation6], 1
    %426 = vsyncpa [#allocation4], 1

</llo_original>
